<compile_context>
chip_gen: v7x
topology: tpu7x:2x2x1
jax: 0.10.0
libtpu: 0.0.40
codegen_flags: <defaults>
</compile_context>

<pallas_src>
import jax
import jax.numpy as jnp
from jax.experimental import pallas as pl
from jax.experimental.pallas import tpu as pltpu


def _cdiv(a, b):
    return -(-a // b)


def _round_up(a, b):
    return _cdiv(a, b) * b


def _default_num_chunks():
    """2 grid chunks on dual-TensorCore parts (v7x-class), else 1 (v5e/v6e)."""
    try:
        kind = jax.devices()[0].device_kind.lower()
    except Exception:  # pragma: no cover - defensive
        return 1
    return 2 if "v7" in kind else 1


def _aux_bce_sum_kernel(x_ref, t_ref, o_ref):
    """Accumulate the sum of BCE-with-logits over one (br, 128) lane-dense tile.

    o_ref is an (8, 128) f32 block that stays resident in VMEM across the inner
    ("arbitrary") grid axis; each step folds its (br, 128) tile of BCE values
    down to (8, 128) with register adds and does one read-modify-write of it.
    """
    step = pl.program_id(1)

    @pl.when(step == 0)
    def _init():
        o_ref[...] = jnp.zeros_like(o_ref)

    # Keep all math in f32 (v5e has no bf16 VPU/EUP); HBM streams may be bf16.
    x = x_ref[...].astype(jnp.float32)            # (br, 128)
    t = t_ref[...].astype(jnp.float32)            # (br, 128)

    # Numerically stable BCE-with-logits: max(x,0) - x*t + log1p(exp(-|x|)).
    # Padded elements were filled with (x=100, t=1) by the wrapper, for which
    # this expression is exactly 0 in f32 -> no per-element mask / iota /
    # select chain in the hot loop and no correction term afterwards.
    # NOTE(v7x): exp + log1p = 2 EUP ops/element; if a bundle dump shows EUP
    # co-binding with HBM, swap in a cheaper softplus approximation here.
    bce = jnp.maximum(x, 0.0) - x * t + jnp.log1p(jnp.exp(-jnp.abs(x)))

    # Fold (br, 128) -> (8, 128): 8 interleaved partial vregs keep the add
    # dependency chain short; total adds = br/8 - 1 (pure VALU, no VMEM
    # accumulator traffic besides the single o_ref read-modify-write).
    nblk = bce.shape[0] // 8
    p = min(8, nblk)
    parts = [bce[8 * i:8 * (i + 1), :] for i in range(p)]
    for r in range(p, nblk):
        parts[r % p] = parts[r % p] + bce[8 * r:8 * (r + 1), :]
    partial = parts[0]
    for i in range(1, p):
        partial = partial + parts[i]

    o_ref[...] += partial


def custom_loss(logits, targets, loss_weight=None, *,
                block_rows=1024, num_parallel_chunks=None):
    """Pallas implementation of CustomLoss.forward (annotator_counts=None path).

    logits:  (N, C) float array
    targets: (N, C+1) float array  (col 0 = label, col 1 = weight, 2: = aux)
    Returns a scalar jnp.float32.
    """
    N, C = logits.shape
    if C < 2:
        raise ValueError("CustomLoss expects at least one auxiliary label column")
    assert targets.shape == (N, C + 1), (targets.shape, (N, C + 1))

    use_weight = loss_weight is not None
    lw = 1.0 if loss_weight is None else float(loss_weight)

    # ---- main-label term: N elements (+ optional weight), plain JAX --------
    # Too small to justify an HBM repack or its own kernel pass (perf review),
    # and keeping it here removes the full-size ones-padded weight stream.
    x0 = logits[:, 0].astype(jnp.float32)
    t0 = targets[:, 0].astype(jnp.float32)
    bce0 = jnp.maximum(x0, 0.0) - x0 * t0 + jnp.log1p(jnp.exp(-jnp.abs(x0)))
    if use_weight:
        bce0 = bce0 * targets[:, 1].astype(jnp.float32)
    main_term = jnp.mean(bce0) * jnp.float32(lw)

    # ---- auxiliary term: Pallas kernel over a lane-dense element stream ----
    LANES = 128
    n_aux = N * (C - 1)

    rows_needed = _cdiv(n_aux, LANES)
    br = _round_up(min(int(block_rows), _round_up(rows_needed, 8)), 8)
    steps_total = _cdiv(rows_needed, br)
    if num_parallel_chunks is None:
        num_parallel_chunks = _default_num_chunks()
    n_chunks = max(1, min(int(num_parallel_chunks), steps_total))
    steps_per_chunk = _cdiv(steps_total, n_chunks)
    rows_pad = n_chunks * steps_per_chunk * br
    padded = rows_pad * LANES

    # Single fused slice+pad+reshape per stream (native dtype preserved).
    # Padding with (x=100, t=1) makes the in-kernel BCE exactly 0 for the tail.
    x_aux = jnp.pad(logits[:, 1:].reshape(-1), (0, padded - n_aux),
                    constant_values=100.0).reshape(rows_pad, LANES)
    t_aux = jnp.pad(targets[:, 2:].reshape(-1), (0, padded - n_aux),
                    constant_values=1.0).reshape(rows_pad, LANES)

    in_spec = pl.BlockSpec((br, LANES),
                           lambda p, i: (p * steps_per_chunk + i, 0))

    partials = pl.pallas_call(
        _aux_bce_sum_kernel,
        out_shape=jax.ShapeDtypeStruct((n_chunks * 8, LANES), jnp.float32),
        grid_spec=pltpu.PrefetchScalarGridSpec(
            num_scalar_prefetch=0,
            grid=(n_chunks, steps_per_chunk),
            in_specs=[in_spec, in_spec],
            out_specs=pl.BlockSpec((8, LANES), lambda p, i: (p, 0)),
        ),
        compiler_params=pltpu.CompilerParams(
            dimension_semantics=("parallel", "arbitrary")),
    )(x_aux, t_aux)

    # Tiny final reduction over per-chunk (8, 128) partial-sum tiles, plus the
    # single 1/(N*(C-1)) normalization (folded out of the hot loop).
    aux_term = jnp.sum(partials) / jnp.float32(n_aux)
    return main_term + aux_term


def _reference_loss(logits, targets, loss_weight=None):
    """Pure-JAX reference replicating the PyTorch module (default path)."""
    x = logits.astype(jnp.float32)
    t = targets.astype(jnp.float32)

    def bce(a, b):
        return jnp.maximum(a, 0.0) - a * b + jnp.log1p(jnp.exp(-jnp.abs(a)))

    l1 = bce(x[:, 0:1], t[:, 0:1])
    if loss_weight is not None:
        l1 = l1 * t[:, 1:2]
        lw = float(loss_weight)
    else:
        lw = 1.0
    l2 = bce(x[:, 1:], t[:, 2:])
    return jnp.mean(l1) * lw + jnp.mean(l2)


if __name__ == "__main__":
    root = jax.random.PRNGKey(0)
    key_a, key_b = jax.random.split(root, 2)

    def make_inputs(key, n, c):
        k1, k2, k3, k4 = jax.random.split(key, 4)
        logits = jax.random.normal(k1, (n, c), dtype=jnp.float32)
        main = jax.random.bernoulli(k2, 0.5, (n, 1)).astype(jnp.float32)
        weight = jax.random.uniform(k3, (n, 1), dtype=jnp.float32)
        aux = jax.random.bernoulli(k4, 0.5, (n, c - 1)).astype(jnp.float32)
        targets = jnp.concatenate([main, weight, aux], axis=1)  # (n, c+1)
        return logits, targets

    # Small shape: batch=8, C=4 (1 main + 3 auxiliary labels), single tile.
    logits, targets = make_inputs(key_a, 8, 4)

    out = jax.block_until_ready(custom_loss(logits, targets, loss_weight=None))
    ref = _reference_loss(logits, targets, loss_weight=None)
    assert jnp.allclose(out, ref, rtol=1e-5, atol=1e-5), (out, ref)

    out_w = jax.block_until_ready(custom_loss(logits, targets, loss_weight=0.7))
    ref_w = _reference_loss(logits, targets, loss_weight=0.7)
    assert jnp.allclose(out_w, ref_w, rtol=1e-5, atol=1e-5), (out_w, ref_w)

    # Larger batch (N=1024) with a tiny block and 2 chunks to exercise the
    # multi-step pipelined grid, the parallel chunk axis and padded-tail tiles.
    logits2, targets2 = make_inputs(key_b, 1024, 4)

    out2 = jax.block_until_ready(
        custom_loss(logits2, targets2, loss_weight=None,
                    block_rows=8, num_parallel_chunks=2))
    ref2 = _reference_loss(logits2, targets2, loss_weight=None)
    assert jnp.allclose(out2, ref2, rtol=1e-5, atol=1e-5), (out2, ref2)

    out2_w = jax.block_until_ready(
        custom_loss(logits2, targets2, loss_weight=0.7,
                    block_rows=8, num_parallel_chunks=2))
    ref2_w = _reference_loss(logits2, targets2, loss_weight=0.7)
    assert jnp.allclose(out2_w, ref2_w, rtol=1e-5, atol=1e-5), (out2_w, ref2_w)

    # bf16 HBM streams (kernel upcasts to f32 internally).
    logits_bf = logits2.astype(jnp.bfloat16)
    targets_bf = targets2.astype(jnp.bfloat16)
    out3 = jax.block_until_ready(
        custom_loss(logits_bf, targets_bf, loss_weight=None, block_rows=8))
    ref3 = _reference_loss(logits_bf, targets_bf, loss_weight=None)
    assert jnp.allclose(out3, ref3, rtol=1e-4, atol=1e-4), (out3, ref3)

    print("KERNEL_OK")
</pallas_src>

<mosaic_0001>
module attributes {stable_mosaic.version = 11 : i64} {
  func.func @_aux_bce_sum_kernel(%arg0: i32, %arg1: i32, %arg2: memref<8x128xf32, #tpu.memory_space<vmem>>, %arg3: memref<8x128xf32, #tpu.memory_space<vmem>>, %arg4: memref<8x128xf32, #tpu.memory_space<vmem>>) attributes {dimension_semantics = [#tpu.dimension_semantics<parallel>, #tpu.dimension_semantics<arbitrary>], iteration_bounds = array<i64: 1, 1>, scalar_prefetch = 0 : i64, scratch_operands = 0 : i64, tpu.core_type = #tpu.core_type<tc>, window_params = [{transform_indices = @transform_0, window_bounds = array<i64: 8, 128>}, {transform_indices = @transform_1, window_bounds = array<i64: 8, 128>}, {transform_indices = @transform_2, window_bounds = array<i64: 8, 128>}]} {
    %c0_i32 = arith.constant 0 : i32
    %0 = arith.cmpi eq, %arg1, %c0_i32 : i32
    %1 = arith.extui %0 : i1 to i32
    %c0_i32_0 = arith.constant 0 : i32
    %2 = arith.cmpi ne, %1, %c0_i32_0 : i32
    scf.if %2 {
      %cst_9 = arith.constant 0.000000e+00 : f32
      %18 = vector.broadcast %cst_9 : f32 to vector<8x128xf32>
      %c0_10 = arith.constant 0 : index
      %c0_11 = arith.constant 0 : index
      %19 = vector.load %arg4[%c0_10, %c0_11] : memref<8x128xf32, #tpu.memory_space<vmem>>, vector<8x128xf32>
      tpu.vector_store %arg4[%c0_10, %c0_11], %18 {strides = array<i32>} : memref<8x128xf32, #tpu.memory_space<vmem>>, vector<8x128xf32>,
    } else {
    }
    %c0 = arith.constant 0 : index
    %c0_1 = arith.constant 0 : index
    %3 = vector.load %arg2[%c0, %c0_1] : memref<8x128xf32, #tpu.memory_space<vmem>>, vector<8x128xf32>
    %c0_2 = arith.constant 0 : index
    %c0_3 = arith.constant 0 : index
    %4 = vector.load %arg3[%c0_2, %c0_3] : memref<8x128xf32, #tpu.memory_space<vmem>>, vector<8x128xf32>
    %cst = arith.constant 0.000000e+00 : f32
    %5 = vector.broadcast %cst : f32 to vector<8x128xf32>
    %6 = arith.maximumf %3, %5 : vector<8x128xf32>
    %7 = arith.mulf %3, %4 : vector<8x128xf32>
    %8 = arith.subf %6, %7 : vector<8x128xf32>
    %9 = math.absf %3 : vector<8x128xf32>
    %cst_4 = arith.constant 0.000000e+00 : f32
    %10 = vector.broadcast %cst_4 : f32 to vector<8x128xf32>
    %11 = arith.subf %10, %9 : vector<8x128xf32>
    %12 = math.exp %11 : vector<8x128xf32>
    %13 = math.log1p %12 : vector<8x128xf32>
    %14 = arith.addf %8, %13 : vector<8x128xf32>
    %c0_5 = arith.constant 0 : index
    %c0_6 = arith.constant 0 : index
    %15 = vector.load %arg4[%c0_5, %c0_6] : memref<8x128xf32, #tpu.memory_space<vmem>>, vector<8x128xf32>
    %16 = arith.addf %15, %14 : vector<8x128xf32>
    %c0_7 = arith.constant 0 : index
    %c0_8 = arith.constant 0 : index
    %17 = vector.load %arg4[%c0_7, %c0_8] : memref<8x128xf32, #tpu.memory_space<vmem>>, vector<8x128xf32>
    tpu.vector_store %arg4[%c0_7, %c0_8], %16 {strides = array<i32>} : memref<8x128xf32, #tpu.memory_space<vmem>>, vector<8x128xf32>,
    return
  }
  func.func @transform_0(%arg0: i32, %arg1: i32) -> (i32, i32) {
    %c1_i32 = arith.constant 1 : i32
    %0 = arith.muli %arg0, %c1_i32 : i32
    %1 = arith.addi %0, %arg1 : i32
    %c0_i32 = arith.constant 0 : i32
    %c0_i32_0 = arith.constant 0 : i32
    return %1, %c0_i32 : i32, i32
  }
  func.func @transform_1(%arg0: i32, %arg1: i32) -> (i32, i32) {
    %c1_i32 = arith.constant 1 : i32
    %0 = arith.muli %arg0, %c1_i32 : i32
    %1 = arith.addi %0, %arg1 : i32
    %c0_i32 = arith.constant 0 : i32
    %c0_i32_0 = arith.constant 0 : i32
    return %1, %c0_i32 : i32, i32
  }
  func.func @transform_2(%arg0: i32, %arg1: i32) -> (i32, i32) {
    %c0_i32 = arith.constant 0 : i32
    %c0_i32_0 = arith.constant 0 : i32
    return %arg0, %c0_i32 : i32, i32
  }
}

</mosaic_0001>

<llo_original>
// kernel: tpu_custom_call.1
$region0: #{tpu_custom_call.1}
  #allocation0 [shape = 'u32[]', space=smem, size = 0x4, offset = 0x4, fixed_abs, tag = 'smem constant byte address 0x4 - core index']
  #allocation1 [shape = 'u32[144,128]{1,0:T(1,128)}', space=vmem, size = 0x12000, scoped, tag = 'internal scratch']
  %s0 = inlined_call_operand.hbm [shape: f32[8,128], index: 0, kind: input, shape index: {}]
  %s1 = inlined_call_operand.hbm [shape: f32[8,128], index: 1, kind: input, shape index: {}]
  %s2 = inlined_call_operand.hbm [shape: f32[8,128], index: 2, kind: output, shape index: {}]
  %s3 = sld [smem:[#allocation0]]
  $region30: #{tpu_custom_call.1} parent=0
    _
  %s5 = ssub.s32 1, %s3
  %s6 = scalar_select 0, %s5, %s3
  $region1: #{tpu_custom_call.1} parent=0
    #allocation2 [shape = 'u8[4096]{0}', space=vmem, size = 0x1000, scoped, tag = 'input window, operand 0, single buffered']
    #allocation3 [shape = 's32[1]{0}', space=sflag, size = 0x4, scoped, tag = 'scoped memory for tpu_custom_call.1']
    #allocation4 [shape = 's32[1]{0}', space=sflag, size = 0x4, scoped, tag = 'scoped memory for tpu_custom_call.1']
    #allocation5 [shape = 'u8[4096]{0}', space=vmem, size = 0x1000, scoped, tag = 'input window, operand 1, single buffered']
    #allocation6 [shape = 's32[1]{0}', space=sflag, size = 0x4, scoped, tag = 'scoped memory for tpu_custom_call.1']
    #allocation7 [shape = 'u8[4096]{0}', space=vmem, size = 0x1000, scoped, tag = 'output window, operand 0, single buffered']
    %7 = vsyncpa [#allocation3], 0
    %8 = vsyncpa [#allocation6], 0
    %9 = vsyncpa [#allocation4], 0
    // Predicated region
    $region2: #{tpu_custom_call.1} parent=1 // pred_check
      _
    $region3: #{tpu_custom_call.1} parent=1 // pred_check_branch
      %11 = sbr.rel (0) target = $region5
    $region4: #{tpu_custom_call.1} parent=1 // pred_region
      %s12 = sadd.s32 0, 0
      %s14 = ssub.s32 128, 128
      %15 = vsyncadd [#allocation3], %s14
      %s16 = smul.addr %s12, 128
      %s17 = scalar_lea.hbm %s0, %s16
      %s19 = sshll.u32 [#allocation2], 4
      %s20 = int_to_ptr.vmem [resolvable:$true] %s19
      %22 = dma.hbm_to_vmem [thread:$0]  %s17, 128, %s20, [#allocation3]
    $region5: #{tpu_custom_call.1} parent=1 // pred_fallthru
      _
    // Predicated region
    $region6: #{tpu_custom_call.1} parent=1 // pred_check
      _
    $region7: #{tpu_custom_call.1} parent=1 // pred_check_branch
      %24 = sbr.rel (0) target = $region9
    $region8: #{tpu_custom_call.1} parent=1 // pred_region
      %s25 = sadd.s32 0, 0
      %s27 = ssub.s32 128, 128
      %28 = vsyncadd [#allocation6], %s27
      %s29 = smul.addr %s25, 128
      %s30 = scalar_lea.hbm %s1, %s29
      %s32 = sshll.u32 [#allocation5], 4
      %s33 = int_to_ptr.vmem [resolvable:$true] %s32
      %35 = dma.hbm_to_vmem [thread:$0]  %s30, 128, %s33, [#allocation6]
    $region9: #{tpu_custom_call.1} parent=1 // pred_fallthru
      _
    // Predicated region
    $region10: #{tpu_custom_call.1} parent=1 // pred_check
      _
    $region11: #{tpu_custom_call.1} parent=1 // pred_check_branch
      %37 = sbr.rel (0) target = $region13
    $region12: #{tpu_custom_call.1} parent=1 // pred_region
      %38 = dma.done [#allocation3], 128
    $region13: #{tpu_custom_call.1} parent=1 // pred_fallthru
      _
    // Predicated region
    $region14: #{tpu_custom_call.1} parent=1 // pred_check
      _
    $region15: #{tpu_custom_call.1} parent=1 // pred_check_branch
      %40 = sbr.rel (0) target = $region17
    $region16: #{tpu_custom_call.1} parent=1 // pred_region
      %41 = dma.done [#allocation6], 128
    $region17: #{tpu_custom_call.1} parent=1 // pred_fallthru
      _
    %s42 = sadd.s32 0, 0
    %s43 = sadd.s32 0, 0
    %p44 = scmp.eq.s32.totalorder 0, 0
    // Predicated region
    $region18: #{tpu_custom_call.1} parent=1 // pred_check
      %p45 = pneg %p44
    $region19: #{tpu_custom_call.1} parent=1 // pred_check_branch
      %47 = sbr.rel (%p45) target = $region21
    $region20: #{tpu_custom_call.1} parent=1 // pred_region
      %48 = vst [vmem:[#allocation7] sm:$0xff] 0.0
    $region21: #{tpu_custom_call.1} parent=1 // pred_fallthru
      _
    %v49 = vld [vmem:[#allocation2] sm:$0xff]
    %v50 = vld [vmem:[#allocation5] sm:$0xff]
    %v51 = vmax.f32 %v49, 0.0
    %v52 = vmul.f32 %v49, %v50
    %v53 = vsub.f32 %v51, %v52
    %v54 = vand.u32 2147483647, %v49
    %v55 = vsub.f32 0.0, %v54
    %v56 = vmul.f32 %v55, 1.442695
    %v57 = vpow.pop %v56
    %v58 = vadd.f32 %v57, 1.0
    %v59 = vlog2.pop %v58
    %v60 = vmul.f32 %v59, 0.6931472
    %v61 = vmul.f32 -0.5, %v57
    %v62 = vadd.f32 %v61, 1.0
    %v63 = vmul.f32 %v62, %v57
    %v64 = vand.u32 2147483647, %v57
    %vm65 = vcmp.lt.f32.partialorder %v64, 0.0004427343
    %v66 = vsel %vm65, %v63, %v60
    %v67 = vadd.f32 %v53, %v66
    %v68 = vld [vmem:[#allocation7] sm:$0xff]
    %v69 = vadd.f32 %v68, %v67
    %70 = vst [vmem:[#allocation7] sm:$0xff] %v69
    // Predicated region
    $region22: #{tpu_custom_call.1} parent=1 // pred_check
      _
    $region23: #{tpu_custom_call.1} parent=1 // pred_check_branch
      %72 = sbr.rel (0) target = $region25
    $region24: #{tpu_custom_call.1} parent=1 // pred_region
      %s74 = ssub.s32 128, 128
      %75 = vsyncadd [#allocation4], %s74
      %s77 = sshll.u32 [#allocation7], 4
      %s78 = int_to_ptr.vmem [resolvable:$true] %s77
      %80 = dma.vmem_to_hbm [thread:$0]  %s78, 128, %s2, [#allocation4]
    $region25: #{tpu_custom_call.1} parent=1 // pred_fallthru
      _
    // Predicated region
    $region26: #{tpu_custom_call.1} parent=1 // pred_check
      _
    $region27: #{tpu_custom_call.1} parent=1 // pred_check_branch
      %82 = sbr.rel (0) target = $region29
    $region28: #{tpu_custom_call.1} parent=1 // pred_region
      %83 = dma.done [#allocation4], 128
    $region29: #{tpu_custom_call.1} parent=1 // pred_fallthru
      _
    %84 = vsyncpa [#allocation3], 1
    %85 = vsyncpa [#allocation6], 1
    %86 = vsyncpa [#allocation4], 1

</llo_original>
